<compile_context>
chip_gen: v5e
topology: v5e:2x2
jax: 0.10.0
libtpu: 0.0.40
codegen_flags: <defaults>
</compile_context>

<pallas_src>
import functools

import jax
import jax.numpy as jnp
from jax.experimental import pallas as pl
from jax.experimental.pallas import tpu as pltpu


def _sigmoid_via_tanh(z):
    # sigmoid(z) == 0.5 * (1 + tanh(z / 2)); single EUP push per element.
    return 0.5 * (1.0 + jnp.tanh(0.5 * z))


def _gated_kernel_stacked(w_ref, x_ref, o_ref, *, C):
    # w_ref: (2C, C) stacked [Wr; Wf], resident in VMEM across the grid.
    # x_ref, o_ref: (C, tile_L); batch dim squeezed out by the BlockSpec.
    x = x_ref[...]
    z = jnp.dot(w_ref[...], x, preferred_element_type=jnp.float32)  # (2C, tile_L)
    real = jnp.tanh(z[:C, :])            # C % 8 == 0 -> sublane-aligned slices
    forget = _sigmoid_via_tanh(z[C:, :])
    o_ref[...] = (real * forget).astype(o_ref.dtype)


def _gated_kernel_split(wr_ref, wf_ref, x_ref, o_ref):
    # Fallback for C % 8 != 0: two small matmuls, no misaligned row slice.
    x = x_ref[...]
    real = jnp.tanh(jnp.dot(wr_ref[...], x, preferred_element_type=jnp.float32))
    forget = _sigmoid_via_tanh(
        jnp.dot(wf_ref[...], x, preferred_element_type=jnp.float32))
    o_ref[...] = (real * forget).astype(o_ref.dtype)


def _vmem_limit_bytes():
    """Generation-aware scoped-VMEM limit (v7x: 64 MiB phys, v5e/v6e: 128 MiB)."""
    try:
        cap = int(pltpu.get_tpu_info().vmem_capacity_bytes)
    except Exception:
        cap = 64 << 20                      # assume the smallest (v7x) if query fails
    return min((cap * 3) // 4, 110 << 20)   # leave headroom for Mosaic scratch


def _pick_tile_l(l_padded, C, dtype_bytes, tile_budget, min_l_tiles):
    """Largest multiple of 128 dividing l_padded under the live-buffer budget."""
    # Live pipeline buffers per step: x tile + out tile, each double-buffered.
    max_elems = max(128, tile_budget // (4 * C * dtype_bytes))
    cap = min(l_padded, (max_elems // 128) * 128, 2048)
    if min_l_tiles > 1:                      # force >=2 L tiles (v7x megacore, B==1)
        cap = min(cap, max(128, ((l_padded // min_l_tiles) // 128) * 128))
    t = max(128, (cap // 128) * 128)
    while l_padded % t != 0:                 # l_padded % 128 == 0 -> terminates
        t -= 128
    return t


def gated_activation(x, weights):
    """JAX/Pallas equivalent of GatedActivation.forward(x).

    x:       (B, C, L)
    weights: (C, C, 2) -- [:, :, 0] = real-gate weight, [:, :, 1] = forget-gate
                          weight (kernel_size=1, bias-free conv1d).
    """
    B, C, L = x.shape
    assert weights.shape == (C, C, 2), weights.shape

    dtype_bytes = jnp.dtype(x.dtype).itemsize
    vmem_limit = _vmem_limit_bytes()
    tile_budget = vmem_limit // 2

    # Pad L up to a multiple of 128: lane-dense tiles, unmasked stores, and
    # the L axis always pipelines. Tail (zeros -> tanh(0)*sigmoid(0)=0) is
    # trimmed after the call.
    l_padded = ((L + 127) // 128) * 128
    x_in = x if l_padded == L else jnp.pad(x, ((0, 0), (0, 0), (0, l_padded - L)))

    min_l_tiles = 2 if (B == 1 and l_padded >= 256) else 1
    tile_l = _pick_tile_l(l_padded, C, dtype_bytes, tile_budget, min_l_tiles)
    grid = (B, l_padded // tile_l)

    x_spec = pl.BlockSpec((None, C, tile_l), lambda b, l: (b, 0, l))
    out_spec = pl.BlockSpec((None, C, tile_l), lambda b, l: (b, 0, l))
    out_shape = jax.ShapeDtypeStruct((B, C, l_padded), x.dtype)
    compiler_params = pltpu.CompilerParams(
        dimension_semantics=("parallel", "parallel"),
        vmem_limit_bytes=vmem_limit)
    # TODO(synk): consider pipeline_mode=pl.Buffered(3) on x_spec if profiling
    # shows exposed DMA at very small C.

    if C % 8 == 0:
        # Single (2C, C) @ (C, tile_L) matmul feeding both gates.
        w_stacked = jnp.moveaxis(weights, 2, 0).reshape(2 * C, C).astype(x.dtype)
        out = pl.pallas_call(
            functools.partial(_gated_kernel_stacked, C=C),
            out_shape=out_shape,
            grid=grid,
            in_specs=[
                pl.BlockSpec((2 * C, C), lambda b, l: (0, 0)),  # resident weights
                x_spec,
            ],
            out_specs=out_spec,
            compiler_params=compiler_params,
        )(w_stacked, x_in)
    else:
        w_real = weights[:, :, 0].astype(x.dtype)
        w_forget = weights[:, :, 1].astype(x.dtype)
        out = pl.pallas_call(
            _gated_kernel_split,
            out_shape=out_shape,
            grid=grid,
            in_specs=[
                pl.BlockSpec((C, C), lambda b, l: (0, 0)),      # Wr (resident)
                pl.BlockSpec((C, C), lambda b, l: (0, 0)),      # Wf (resident)
                x_spec,
            ],
            out_specs=out_spec,
            compiler_params=compiler_params,
        )(w_real, w_forget, x_in)

    if l_padded != L:
        out = out[:, :, :L]
    return out


def _reference(x, weights):
    # Pure-JAX mirror of the PyTorch forward (computed in f32).
    wr = weights[:, :, 0].astype(jnp.float32)
    wf = weights[:, :, 1].astype(jnp.float32)
    xf = x.astype(jnp.float32)
    real = jnp.tanh(jnp.einsum("oc,bcl->bol", wr, xf))
    forget = jax.nn.sigmoid(jnp.einsum("oc,bcl->bol", wf, xf))
    return real * forget


if __name__ == "__main__":
    key = jax.random.PRNGKey(0)
    kw, kx, kw2, kx2, kw3, kx3 = jax.random.split(key, 6)

    # --- small shape consistent with the module's test harness --------------
    # C=4 (not %8) and L=16 (not %128): exercises the split-kernel + L-padding
    # paths.
    batch, channels, length = 2, 4, 16
    weights = 0.5 * jax.random.normal(kw, (channels, channels, 2), jnp.float32)
    x = jax.random.normal(kx, (batch, channels, length), jnp.float32)

    out = jax.block_until_ready(gated_activation(x, weights))
    ref = _reference(x, weights)
    assert out.shape == (batch, channels, length)
    assert jnp.allclose(out, ref, atol=1e-5, rtol=1e-5)

    # --- larger, lane-dense shape: stacked-(2C,C) weight + tiled L ----------
    b2, c2, l2 = 4, 16, 1024
    weights2 = 0.5 * jax.random.normal(kw2, (c2, c2, 2), jnp.float32)
    x2 = jax.random.normal(kx2, (b2, c2, l2), jnp.float32)

    out2 = jax.block_until_ready(gated_activation(x2, weights2))
    ref2 = _reference(x2, weights2)
    assert out2.shape == (b2, c2, l2)
    assert jnp.allclose(out2, ref2, atol=1e-5, rtol=1e-5)

    # --- bf16 end-to-end path (f32 accumulation inside the kernel) ----------
    b3, c3, l3 = 2, 32, 512
    weights3 = (0.5 * jax.random.normal(kw3, (c3, c3, 2), jnp.float32))
    x3 = jax.random.normal(kx3, (b3, c3, l3), jnp.float32).astype(jnp.bfloat16)

    out3 = jax.block_until_ready(gated_activation(x3, weights3))
    ref3 = _reference(x3, weights3)
    assert out3.shape == (b3, c3, l3)
    assert jnp.allclose(out3.astype(jnp.float32), ref3, atol=2e-2, rtol=2e-2)

    print("KERNEL_OK")
</pallas_src>

<mosaic_0001>
module attributes {stable_mosaic.version = 11 : i64} {
  func.func @_gated_kernel_split(%arg0: i32, %arg1: i32, %arg2: memref<4x4xf32, #tpu.memory_space<vmem>>, %arg3: memref<4x4xf32, #tpu.memory_space<vmem>>, %arg4: memref<1x4x128xf32, #tpu.memory_space<vmem>>, %arg5: memref<1x4x128xf32, #tpu.memory_space<vmem>>) attributes {dimension_semantics = [#tpu.dimension_semantics<parallel>, #tpu.dimension_semantics<parallel>], iteration_bounds = array<i64: 2, 1>, scalar_prefetch = 0 : i64, scratch_operands = 0 : i64, tpu.core_type = #tpu.core_type<tc>, window_params = [{pipeline_mode = #tpu.pipeline_mode<synchronous>, transform_indices = @transform_0, window_bounds = array<i64: 4, 4>}, {pipeline_mode = #tpu.pipeline_mode<synchronous>, transform_indices = @transform_1, window_bounds = array<i64: 4, 4>}, {transform_indices = @transform_2, window_bounds = array<i64: 1, 4, 128>}, {transform_indices = @transform_3, window_bounds = array<i64: 1, 4, 128>}]} {
    %c0 = arith.constant 0 : index
    %c0_0 = arith.constant 0 : index
    %c0_1 = arith.constant 0 : index
    %0 = vector.load %arg4[%c0, %c0_0, %c0_1] : memref<1x4x128xf32, #tpu.memory_space<vmem>>, vector<1x4x128xf32>
    %1 = vector.shape_cast %0 : vector<1x4x128xf32> to vector<4x128xf32>
    %c0_2 = arith.constant 0 : index
    %c0_3 = arith.constant 0 : index
    %2 = vector.load %arg2[%c0_2, %c0_3] : memref<4x4xf32, #tpu.memory_space<vmem>>, vector<4x4xf32>
    %cst = arith.constant dense<0.000000e+00> : vector<4x128xf32>
    %3 = tpu.matmul %2, %1, %cst {dimension_numbers = #tpu.dot_dimension_numbers<[1], [0], [0], [1], [0, 0, 1, 1], [], []>} : vector<4x4xf32>, vector<4x128xf32>, vector<4x128xf32> -> vector<4x128xf32>
    %4 = math.tanh %3 : vector<4x128xf32>
    %c0_4 = arith.constant 0 : index
    %c0_5 = arith.constant 0 : index
    %5 = vector.load %arg3[%c0_4, %c0_5] : memref<4x4xf32, #tpu.memory_space<vmem>>, vector<4x4xf32>
    %cst_6 = arith.constant dense<0.000000e+00> : vector<4x128xf32>
    %6 = tpu.matmul %5, %1, %cst_6 {dimension_numbers = #tpu.dot_dimension_numbers<[1], [0], [0], [1], [0, 0, 1, 1], [], []>} : vector<4x4xf32>, vector<4x128xf32>, vector<4x128xf32> -> vector<4x128xf32>
    %cst_7 = arith.constant 5.000000e-01 : f32
    %7 = vector.broadcast %cst_7 : f32 to vector<4x128xf32>
    %8 = arith.mulf %7, %6 : vector<4x128xf32>
    %9 = math.tanh %8 : vector<4x128xf32>
    %cst_8 = arith.constant 1.000000e+00 : f32
    %10 = vector.broadcast %cst_8 : f32 to vector<4x128xf32>
    %11 = arith.addf %10, %9 : vector<4x128xf32>
    %cst_9 = arith.constant 5.000000e-01 : f32
    %12 = vector.broadcast %cst_9 : f32 to vector<4x128xf32>
    %13 = arith.mulf %12, %11 : vector<4x128xf32>
    %14 = arith.mulf %4, %13 : vector<4x128xf32>
    %c0_10 = arith.constant 0 : index
    %c0_11 = arith.constant 0 : index
    %c0_12 = arith.constant 0 : index
    %15 = vector.load %arg5[%c0_10, %c0_11, %c0_12] : memref<1x4x128xf32, #tpu.memory_space<vmem>>, vector<1x4x128xf32>
    %16 = vector.shape_cast %15 : vector<1x4x128xf32> to vector<4x128xf32>
    %17 = vector.shape_cast %14 : vector<4x128xf32> to vector<1x4x128xf32>
    tpu.vector_store %arg5[%c0_10, %c0_11, %c0_12], %17 {strides = array<i32>} : memref<1x4x128xf32, #tpu.memory_space<vmem>>, vector<1x4x128xf32>,
    return
  }
  func.func @transform_0(%arg0: i32, %arg1: i32) -> (i32, i32) {
    %c0_i32 = arith.constant 0 : i32
    %c0_i32_0 = arith.constant 0 : i32
    %c0_i32_1 = arith.constant 0 : i32
    return %c0_i32, %c0_i32_0 : i32, i32
  }
  func.func @transform_1(%arg0: i32, %arg1: i32) -> (i32, i32) {
    %c0_i32 = arith.constant 0 : i32
    %c0_i32_0 = arith.constant 0 : i32
    %c0_i32_1 = arith.constant 0 : i32
    return %c0_i32, %c0_i32_0 : i32, i32
  }
  func.func @transform_2(%arg0: i32, %arg1: i32) -> (i32, i32, i32) {
    %c0_i32 = arith.constant 0 : i32
    %c0_i32_0 = arith.constant 0 : i32
    return %arg0, %c0_i32, %arg1 : i32, i32, i32
  }
  func.func @transform_3(%arg0: i32, %arg1: i32) -> (i32, i32, i32) {
    %c0_i32 = arith.constant 0 : i32
    %c0_i32_0 = arith.constant 0 : i32
    return %arg0, %c0_i32, %arg1 : i32, i32, i32
  }
}

</mosaic_0001>

<llo_original>
// kernel: tpu_custom_call.1
$region0: #{tpu_custom_call.1}
  #allocation0 [shape = 'u32[]', space=smem, size = 0x4, offset = 0x4, fixed_abs, tag = 'smem constant byte address 0x4 - core index']
  #allocation1 [shape = 'u32[72,128]{1,0:T(1,128)}', space=vmem, size = 0x9000, scoped, tag = 'internal scratch']
  %s0 = inlined_call_operand.hbm [shape: f32[4,4], index: 0, kind: input, shape index: {}]
  %s1 = inlined_call_operand.hbm [shape: f32[4,4], index: 1, kind: input, shape index: {}]
  %s2 = inlined_call_operand.hbm [shape: f32[2,4,128], index: 2, kind: input, shape index: {}]
  %s3 = inlined_call_operand.hbm [shape: f32[2,4,128], index: 3, kind: output, shape index: {}]
  %s4 = sld [smem:[#allocation0]]
  $region57: #{tpu_custom_call.1} parent=0
    _
  %s6 = ssub.s32 1, %s4
  %s7 = scalar_select 0, %s6, %s4
  $region1: #{tpu_custom_call.1} parent=0
    #allocation2 [shape = 'u8[2048]{0}', space=vmem, size = 0x800, scoped, tag = 'input window, operand 0, single buffered']
    #allocation3 [shape = 's32[2]{0}', space=sflag, size = 0x8, scoped, tag = 'scoped memory for tpu_custom_call.1']
    #allocation4 [shape = 's32[2]{0}', space=sflag, size = 0x8, scoped, tag = 'scoped memory for tpu_custom_call.1']
    #allocation5 [shape = 'u8[2048]{0}', space=vmem, size = 0x800, scoped, tag = 'input window, operand 1, single buffered']
    #allocation6 [shape = 's32[1]{0}', space=sflag, size = 0x4, scoped, tag = 'scoped memory for tpu_custom_call.1']
    #allocation7 [shape = 'u8[4096]{0}', space=vmem, size = 0x1000, scoped, tag = 'input window, operand 2']
    #allocation8 [shape = 'u8[4096]{0}', space=vmem, size = 0x1000, scoped, tag = 'output window, operand 0']
    %8 = vsyncpa [#allocation3], 0
    %9 = vsyncpa [#allocation6], 0
    %10 = vsyncpa [#allocation4], 0
    %s11 = scalar_lea.sflag [#allocation4], 1
    %12 = vsyncpa %s11, 0
    loop: start=0, step=1, limit=4
    $region2: #{tpu_custom_call.1} parent=1 // loop_pre_header
      _
    $region3: #{tpu_custom_call.1} parent=1 // loop_header
      %s14 = sphi 0, %s18
      %p15 = scmp.ge.s32.totalorder %s14, 4
      %s21 = sphi 0, %s33
      %s22 = sphi 0, %s29
      %s23 = sphi 0, %s21
      %s24 = sphi 0, %s22
      %s25 = sphi 0, %s23
      %s26 = sphi 0, %s24
      %s34 = sphi 0, %s34
      %s36 = sphi 0, %s34
      %s37 = sphi 0, %s36
      %s51 = sphi 0, %s37
      %s55 = sphi 0, %s55
      %s57 = sphi 0, %s55
      %s58 = sphi 0, %s57
      %s72 = sphi 0, %s58
      %s80 = sphi 0, %s82
      %s83 = sphi 0, %s80
      %s84 = sphi 0, %s83
      %s100 = sphi 0, %s84
      %s108 = sphi 0, %s110
      %s111 = sphi 0, %s108
      %s112 = sphi 0, %s111
      %s128 = sphi 0, %s112
    $region4: #{tpu_custom_call.1} parent=1 // loop_header_branch
      %17 = sbr.rel (%p15) target = $region8
    $region5: #{tpu_custom_call.1} parent=1 // loop_body
      %s19 = ssub.s32 %s14, 1
      %s20 = ssub.s32 %s14, 2
      %s27 = sadd.s32 1, %s22
      %p28 = scmp.ge.s32.totalorder %s27, 1
      %s29 = scalar_select %p28, 0, %s27
      %s30 = sadd.s32 1, %s21
      %s31 = scalar_select %p28, %s30, %s21
      %p32 = scmp.ge.s32.totalorder %s31, 2
      %s33 = scalar_select %p32, 0, %s31
      %s35 = sadd.s32 %s34, 1
      %p38 = scmp.eq.s32.totalorder %s14, 1
      %p39 = scmp.ne.s32.totalorder %s34, %s36
      %p40 = scmp.eq.s32.totalorder %s14, 0
      %p41 = por %p39, %p40
      %p42 = scmp.ne.s32.totalorder %s34, %s36
      %p43 = scmp.eq.s32.totalorder %s19, 1
      %p44 = por %p42, %p43
      %p45 = scmp.ne.s32.totalorder %s36, %s37
      %p46 = scmp.eq.s32.totalorder %s19, 0
      %p47 = por %p45, %p46
      %p48 = scmp.ne.s32.totalorder %s36, %s37
      %p49 = scmp.eq.s32.totalorder %s20, 1
      %p50 = por %p48, %p49
      %p52 = scmp.ne.s32.totalorder %s37, %s51
      %p53 = scmp.eq.s32.totalorder %s20, 0
      %p54 = por %p52, %p53
      %s56 = sadd.s32 %s55, 1
      %p59 = scmp.eq.s32.totalorder %s14, 1
      %p60 = scmp.ne.s32.totalorder %s55, %s57
      %p61 = scmp.eq.s32.totalorder %s14, 0
      %p62 = por %p60, %p61
      %p63 = scmp.ne.s32.totalorder %s55, %s57
      %p64 = scmp.eq.s32.totalorder %s19, 1
      %p65 = por %p63, %p64
      %p66 = scmp.ne.s32.totalorder %s57, %s58
      %p67 = scmp.eq.s32.totalorder %s19, 0
      %p68 = por %p66, %p67
      %p69 = scmp.ne.s32.totalorder %s57, %s58
      %p70 = scmp.eq.s32.totalorder %s20, 1
      %p71 = por %p69, %p70
      %p73 = scmp.ne.s32.totalorder %s58, %s72
      %p74 = scmp.eq.s32.totalorder %s20, 0
      %p75 = por %p73, %p74
      %s76 = ssub.s32 %s21, %s33
      %s77 = ssub.s32 %s22, %s29
      %s78 = sor.u32 %s76, %s77
      %p79 = scmp.eq.s32.totalorder %s78, 0
      %s81 = sadd.s32 %s80, 1
      %s82 = scalar_select %p79, %s80, %s81
      %p85 = pneg %p79
      %p86 = scmp.eq.s32.totalorder %s14, 1
      %p87 = por %p85, %p86
      %p88 = scmp.ne.s32.totalorder %s80, %s83
      %p89 = scmp.eq.s32.totalorder %s14, 0
      %p90 = por %p88, %p89
      %p91 = scmp.ne.s32.totalorder %s80, %s83
      %p92 = scmp.eq.s32.totalorder %s19, 1
      %p93 = por %p91, %p92
      %p94 = scmp.ne.s32.totalorder %s83, %s84
      %p95 = scmp.eq.s32.totalorder %s19, 0
      %p96 = por %p94, %p95
      %p97 = scmp.ne.s32.totalorder %s83, %s84
      %p98 = scmp.eq.s32.totalorder %s20, 1
      %p99 = por %p97, %p98
      %p101 = scmp.ne.s32.totalorder %s84, %s100
      %p102 = scmp.eq.s32.totalorder %s20, 0
      %p103 = por %p101, %p102
      %s104 = ssub.s32 %s21, %s33
      %s105 = ssub.s32 %s22, %s29
      %s106 = sor.u32 %s104, %s105
      %p107 = scmp.eq.s32.totalorder %s106, 0
      %s109 = sadd.s32 %s108, 1
      %s110 = scalar_select %p107, %s108, %s109
      %p113 = pneg %p107
      %p114 = scmp.eq.s32.totalorder %s14, 1
      %p115 = por %p113, %p114
      %p116 = scmp.ne.s32.totalorder %s108, %s111
      %p117 = scmp.eq.s32.totalorder %s14, 0
      %p118 = por %p116, %p117
      %p119 = scmp.ne.s32.totalorder %s108, %s111
      %p120 = scmp.eq.s32.totalorder %s19, 1
      %p121 = por %p119, %p120
      %p122 = scmp.ne.s32.totalorder %s111, %s112
      %p123 = scmp.eq.s32.totalorder %s19, 0
      %p124 = por %p122, %p123
      %p125 = scmp.ne.s32.totalorder %s111, %s112
      %p126 = scmp.eq.s32.totalorder %s20, 1
      %p127 = por %p125, %p126
      %p129 = scmp.ne.s32.totalorder %s112, %s128
      %p130 = scmp.eq.s32.totalorder %s20, 0
      %p131 = por %p129, %p130
      %p132 = scmp.le.s32.totalorder 1, %s14
      %p133 = scmp.lt.s32.totalorder %s14, 3
      %p134 = pnand %p132, %p133
      %p135 = pneg %p134
      // Predicated region
      $region9: #{tpu_custom_call.1} parent=5 // pred_check
        _
      $region10: #{tpu_custom_call.1} parent=5 // pred_check_branch
        %137 = sbr.rel (%p134) target = $region12
      $region11: #{tpu_custom_call.1} parent=5 // pred_region
        %s138 = ssub.s32 %s14, 1
        // Predicated region
        $region13: #{tpu_custom_call.1} parent=11 // pred_check
          %p139 = pneg %p47
        $region14: #{tpu_custom_call.1} parent=11 // pred_check_branch
          %141 = sbr.rel (%p139) target = $region16
        $region15: #{tpu_custom_call.1} parent=11 // pred_region
          %143 = vsyncadd [#allocation3], 0
          %s145 = sshll.u32 %s0, 4
          %s146 = int_to_ptr.hbm [resolvable:$true] %s145
          %s147 = sshll.u32 [#allocation2], 4
          %s148 = int_to_ptr.vmem [resolvable:$true] %s147
          %150 = dma.hbm_to_vmem [thread:$0]  %s146, 64, %s148, [#allocation3]
        $region16: #{tpu_custom_call.1} parent=11 // pred_fallthru
          _
        // Predicated region
        $region17: #{tpu_custom_call.1} parent=11 // pred_check
          %p151 = pneg %p68
        $region18: #{tpu_custom_call.1} parent=11 // pred_check_branch
          %153 = sbr.rel (%p151) target = $region20
        $region19: #{tpu_custom_call.1} parent=11 // pred_region
          %155 = vsyncadd [#allocation6], 0
          %s157 = sshll.u32 %s1, 4
          %s158 = int_to_ptr.hbm [resolvable:$true] %s157
          %s159 = sshll.u32 [#allocation5], 4
          %s160 = int_to_ptr.vmem [resolvable:$true] %s159
          %162 = dma.hbm_to_vmem [thread:$0]  %s158, 64, %s160, [#allocation6]
        $region20: #{tpu_custom_call.1} parent=11 // pred_fallthru
          _
      $region12: #{tpu_custom_call.1} parent=5 // pred_fallthru
        _
      %p163 = scmp.lt.s32.totalorder %s14, 2
      // Predicated region
      $region21: #{tpu_custom_call.1} parent=5 // pred_check
        %p164 = pneg %p163
      $region22: #{tpu_custom_call.1} parent=5 // pred_check_branch
        %166 = sbr.rel (%p164) target = $region24
      $region23: #{tpu_custom_call.1} parent=5 // pred_region
        // Predicated region
        $region25: #{tpu_custom_call.1} parent=23 // pred_check
          %p167 = pneg %p90
        $region26: #{tpu_custom_call.1} parent=23 // pred_check_branch
          %169 = sbr.rel (%p167) target = $region28
        $region27: #{tpu_custom_call.1} parent=23 // pred_region
          %s170 = sand.u32 %s14, 1
          %s171 = scalar_lea.sflag [#allocation3], %s170
          %s172 = sand.u32 %s80, 1
          %s173 = smul.addr %s172, 4
          %s174 = scalar_lea.vmem [#allocation7], %s173
          %176 = vsyncadd %s171, 0
          %s177 = sadd.s32 %s22, %s21
          %s178 = smul.addr %s177, 4
          %s179 = scalar_lea.hbm %s2, %s178
          %s181 = sshll.u32 %s179, 4
          %s182 = int_to_ptr.hbm [resolvable:$true] %s181
          %s183 = sshll.u32 %s174, 4
          %s184 = int_to_ptr.vmem [resolvable:$true] %s183
          %186 = dma.hbm_to_vmem [thread:$0]  %s182, 64, %s184, %s171
        $region28: #{tpu_custom_call.1} parent=23 // pred_fallthru
          _
      $region24: #{tpu_custom_call.1} parent=5 // pred_fallthru
        _
      %p187 = scmp.le.s32.totalorder 1, %s14
      %p188 = scmp.lt.s32.totalorder %s14, 3
      %p189 = pnand %p187, %p188
      %p190 = pneg %p189
      // Predicated region
      $region29: #{tpu_custom_call.1} parent=5 // pred_check
        _
      $region30: #{tpu_custom_call.1} parent=5 // pred_check_branch
        %192 = sbr.rel (%p189) target = $region32
      $region31: #{tpu_custom_call.1} parent=5 // pred_region
        %s193 = ssub.s32 %s14, 1
        // Predicated region
        $region33: #{tpu_custom_call.1} parent=31 // pred_check
          %p194 = pneg %p47
        $region34: #{tpu_custom_call.1} parent=31 // pred_check_branch
          %196 = sbr.rel (%p194) target = $region36
        $region35: #{tpu_custom_call.1} parent=31 // pred_region
          %198 = dma.done [#allocation3], 64
        $region36: #{tpu_custom_call.1} parent=31 // pred_fallthru
          _
        // Predicated region
        $region37: #{tpu_custom_call.1} parent=31 // pred_check
          %p199 = pneg %p68
        $region38: #{tpu_custom_call.1} parent=31 // pred_check_branch
          %201 = sbr.rel (%p199) target = $region40
        $region39: #{tpu_custom_call.1} parent=31 // pred_region
          %203 = dma.done [#allocation6], 64
        $region40: #{tpu_custom_call.1} parent=31 // pred_fallthru
          _
        %s204 = sand.u32 %s19, 1
        %s205 = scalar_lea.sflag [#allocation3], %s204
        %s206 = sand.u32 %s83, 1
        %s207 = smul.addr %s206, 4
        %s208 = scalar_lea.vmem [#allocation7], %s207
        // Predicated region
        $region41: #{tpu_custom_call.1} parent=31 // pred_check
          %p209 = pneg %p96
        $region42: #{tpu_custom_call.1} parent=31 // pred_check_branch
          %211 = sbr.rel (%p209) target = $region44
        $region43: #{tpu_custom_call.1} parent=31 // pred_region
          %213 = dma.done %s205, 64
        $region44: #{tpu_custom_call.1} parent=31 // pred_fallthru
          _
        %p214 = pneg %p47
        %p215 = pneg %p44
        %p216 = pneg %p68
        %p217 = pneg %p65
        %s218 = sand.u32 %s19, 1
        %s219 = scalar_lea.sflag [#allocation3], %s218
        %s220 = sand.u32 %s83, 1
        %s221 = smul.addr %s220, 4
        %s222 = scalar_lea.vmem [#allocation7], %s221
        %p223 = pneg %p96
        %p224 = pneg %p93
        %p225 = pneg %p124
        %p226 = pneg %p121
        %s227 = sand.u32 %s111, 1
        %s228 = scalar_lea.sflag [#allocation4], %s227
        %s229 = sand.u32 %s111, 1
        %s230 = smul.addr %s229, 4
        %s231 = scalar_lea.vmem [#allocation8], %s230
        %v232 = vld [vmem:[%s208] sm:$0xf]
        %v233 = vld [vmem:[#allocation2] sm:$0xf]
        %vm234 = vcmask 31744
        %v236 = vsel %vm234, %v233, 0
        %vm238 = vcmask 1043456
        %v240 = vsel %vm238, %v232, 0
        %242 = vmatpush.msra.mxu0 0.0
        %243 = vmatpush.msra.mxu0 0.0
        %244 = vmatpush.msra.mxu0 0.0
        %245 = vmatpush.msra.mxu0 0.0
        %246 = vmatpush.msra.mxu0 0.0
        %247 = vmatpush.msra.mxu0 0.0
        %248 = vmatpush.msra.mxu0 0.0
        %249 = vmatpush.msra.mxu0 0.0
        %250 = vmatpush.msra.mxu0 0.0
        %251 = vmatpush.msra.mxu0 0.0
        %252 = vmatpush.msra.mxu0 0.0
        %253 = vmatpush.msra.mxu0 0.0
        %254 = vmatpush.msra.mxu0 0.0
        %255 = vmatpush.msra.mxu0 0.0
        %256 = vmatpush.msra.mxu0 0.0
        %257 = vmatpush.msra.mxu0 %v240
        %258 = vmatmul.f32.gmra.mxu0 %v236
        %v259 = vpop.f32.mrf.mxu0
        %v260 = vadd.f32 0.0, %v259
        %261 = vdwg.mxu0
        %v262 = vtanh.pop %v260
        %v263 = vld [vmem:[#allocation5] sm:$0xf]
        %v265 = vsel %vm234, %v263, 0
        %267 = vmatpush.msra.mxu0 0.0
        %268 = vmatpush.msra.mxu0 0.0
        %269 = vmatpush.msra.mxu0 0.0
        %270 = vmatpush.msra.mxu0 0.0
        %271 = vmatpush.msra.mxu0 0.0
        %272 = vmatpush.msra.mxu0 0.0
        %273 = vmatpush.msra.mxu0 0.0
        %274 = vmatpush.msra.mxu0 0.0
        %275 = vmatpush.msra.mxu0 0.0
        %276 = vmatpush.msra.mxu0 0.0
        %277 = vmatpush.msra.mxu0 0.0
        %278 = vmatpush.msra.mxu0 0.0
        %279 = vmatpush.msra.mxu0 0.0
        %280 = vmatpush.msra.mxu0 0.0
        %281 = vmatpush.msra.mxu0 0.0
        %282 = vmatpush.msra.mxu0 %v240
        %283 = vmatmul.f32.gmra.mxu0 %v265
        %v284 = vpop.f32.mrf.mxu0
        %v285 = vadd.f32 0.0, %v284
        %286 = vdwg.mxu0
        %v287 = vmul.f32 %v285, 0.5
        %v288 = vtanh.pop %v287
        %v289 = vadd.f32 %v288, 1.0
        %v290 = vmul.f32 %v289, 0.5
        %v291 = vmul.f32 %v262, %v290
        %292 = vst [vmem:[%s231] sm:$0xf] %v291
        %s293 = sand.u32 %s111, 1
        %s294 = scalar_lea.sflag [#allocation4], %s293
        %s295 = sand.u32 %s111, 1
        %s296 = smul.addr %s295, 4
        %s297 = scalar_lea.vmem [#allocation8], %s296
        // Predicated region
        $region45: #{tpu_custom_call.1} parent=31 // pred_check
          %p298 = pneg %p121
        $region46: #{tpu_custom_call.1} parent=31 // pred_check_branch
          %300 = sbr.rel (%p298) target = $region48
        $region47: #{tpu_custom_call.1} parent=31 // pred_region
          %302 = vsyncadd %s294, 0
          %s303 = sadd.s32 %s24, %s23
          %s304 = smul.addr %s303, 4
          %s305 = scalar_lea.hbm %s3, %s304
          %s307 = sshll.u32 %s297, 4
          %s308 = int_to_ptr.vmem [resolvable:$true] %s307
          %s309 = sshll.u32 %s305, 4
          %s310 = int_to_ptr.hbm [resolvable:$true] %s309
          %312 = dma.vmem_to_hbm [thread:$0]  %s308, 64, %s310, %s294
        $region48: #{tpu_custom_call.1} parent=31 // pred_fallthru
          _
      $region32: #{tpu_custom_call.1} parent=5 // pred_fallthru
        _
      %p313 = scmp.le.s32.totalorder 2, %s14
      // Predicated region
      $region49: #{tpu_custom_call.1} parent=5 // pred_check
        %p314 = pneg %p313
      $region50: #{tpu_custom_call.1} parent=5 // pred_check_branch
        %316 = sbr.rel (%p314) target = $region52
      $region51: #{tpu_custom_call.1} parent=5 // pred_region
        %s317 = ssub.s32 %s14, 2
        // Predicated region
        $region53: #{tpu_custom_call.1} parent=51 // pred_check
          %p318 = pneg %p127
        $region54: #{tpu_custom_call.1} parent=51 // pred_check_branch
          %320 = sbr.rel (%p318) target = $region56
        $region55: #{tpu_custom_call.1} parent=51 // pred_region
          %s321 = sand.u32 %s112, 1
          %s322 = scalar_lea.sflag [#allocation4], %s321
          %s323 = sand.u32 %s112, 1
          %s324 = smul.addr %s323, 4
          %s325 = scalar_lea.vmem [#allocation8], %s324
          %327 = dma.done %s322, 64
        $region56: #{tpu_custom_call.1} parent=51 // pred_fallthru
          _
      $region52: #{tpu_custom_call.1} parent=5 // pred_fallthru
        _
    $region6: #{tpu_custom_call.1} parent=1 // loop_footer
      %s18 = sadd.s32 1, %s14
    $region7: #{tpu_custom_call.1} parent=1 // loop_footer_branch
      %13 = sbr.rel target = $region3
    $region8: #{tpu_custom_call.1} parent=1 // loop_exit
      _
    %328 = vsyncpa [#allocation3], 1
    %s329 = scalar_lea.sflag [#allocation3], 1
    %330 = vsyncpa %s329, 1
    %331 = vsyncpa [#allocation6], 1
    %332 = vsyncpa [#allocation4], 1
    %s333 = scalar_lea.sflag [#allocation4], 1
    %334 = vsyncpa %s333, 1

</llo_original>
